<compile_context>
chip_gen: v6e
topology: v6e:2x2x1
jax: 0.10.0
libtpu: 0.0.40
codegen_flags: <defaults>
</compile_context>

<pallas_src>
import math
import jax
import jax.numpy as jnp
from jax.experimental import pallas as pl
from jax.experimental.pallas import tpu as pltpu

# ---- model hyperparameters (mirroring the module; kept small for the example) ----
NINP = 2        # BaseModel ninp (only consumed by the unused autoencoder)
NLATENT = 20    # hard-coded self._nlatent = 20 in PixelRegAutoEncoderRedundant
NHID = 32       # nhid (module default is 200; small here)
NDEPTH = 3      # ndepth -> 1 input layer + (NDEPTH-2) hidden layers + 1 output layer
assert NDEPTH >= 3

TILE_B = 128    # batch tile = lane width (multiple of 128)


def _softplus(x):
    # Numerically stable softplus; same formula used in kernel and reference.
    return jnp.maximum(x, 0.0) + jnp.log(1.0 + jnp.exp(-jnp.abs(x)))


def _mlp_kernel(xT_ref, w1_ref, b1_ref, wh_ref, bh_ref, wo_ref, bo_ref, oT_ref):
    # xT_ref: [NLATENT, TILE_B]  -- batch on the 128-lane axis.
    h = _softplus(
        jnp.dot(w1_ref[...], xT_ref[...], preferred_element_type=jnp.float32)
        + b1_ref[...]
    )
    # Hidden layers: static Python unroll (NDEPTH fixed at trace time).
    for l in range(NDEPTH - 2):
        h = _softplus(
            jnp.dot(wh_ref[l], h, preferred_element_type=jnp.float32)
            + bh_ref[l]
        )
    # Output layer: [NLATENT, NHID] @ [NHID, TILE_B] + [NLATENT, 1]
    oT_ref[...] = (
        jnp.dot(wo_ref[...], h, preferred_element_type=jnp.float32)
        + bo_ref[...]
    ).astype(oT_ref.dtype)


def forward(x, params, *, tile_b=TILE_B):
    """x: [B, NLATENT] f32  ->  dx: [B, NLATENT] f32 (the module's forward output)."""
    w1, b1, wh, bh, wo, bo = params
    B = x.shape[0]
    n_tiles = (B + tile_b - 1) // tile_b
    Bp = n_tiles * tile_b

    xT = x.T                                   # [NLATENT, B]  (lane-dense batch axis)
    if Bp != B:
        # Pad ragged tail with zeros; padded columns are sliced off below.
        xT = jnp.pad(xT, ((0, 0), (0, Bp - B)))

    oT = pl.pallas_call(
        _mlp_kernel,
        out_shape=jax.ShapeDtypeStruct((NLATENT, Bp), jnp.float32),
        grid_spec=pltpu.PrefetchScalarGridSpec(
            num_scalar_prefetch=0,
            grid=(n_tiles,),
            in_specs=[
                pl.BlockSpec((NLATENT, tile_b), lambda i: (0, i)),                # x^T (tiled over batch lanes)
                pl.BlockSpec((NHID, NLATENT), lambda i: (0, 0)),                  # w1  [out, in]
                pl.BlockSpec((NHID, 1), lambda i: (0, 0)),                        # b1  [out, 1]
                pl.BlockSpec((NDEPTH - 2, NHID, NHID), lambda i: (0, 0, 0)),      # stacked hidden weights
                pl.BlockSpec((NDEPTH - 2, NHID, 1), lambda i: (0, 0, 0)),         # stacked hidden biases
                pl.BlockSpec((NLATENT, NHID), lambda i: (0, 0)),                  # w_out [out, in]
                pl.BlockSpec((NLATENT, 1), lambda i: (0, 0)),                     # b_out [out, 1]
            ],
            out_specs=pl.BlockSpec((NLATENT, tile_b), lambda i: (0, i)),
        ),
        compiler_params=pltpu.CompilerParams(
            dimension_semantics=("parallel",),
        ),
    )(xT, w1, b1, wh, bh, wo, bo)

    return oT[:, :B].T


def init_params(key):
    """torch.nn.Linear-style init: U(-1/sqrt(fan_in), 1/sqrt(fan_in)); weights [out, in]."""
    ks = jax.random.split(key, 6)

    def lin(kw, kb, fan_in, fan_out):
        bound = 1.0 / math.sqrt(fan_in)
        w = jax.random.uniform(kw, (fan_out, fan_in), jnp.float32, -bound, bound)
        b = jax.random.uniform(kb, (fan_out, 1), jnp.float32, -bound, bound)
        return w, b

    w1, b1 = lin(ks[0], ks[1], NLATENT, NHID)

    kh = jax.random.split(ks[2], 2 * (NDEPTH - 2))
    wh_list, bh_list = [], []
    for l in range(NDEPTH - 2):
        w, b = lin(kh[2 * l], kh[2 * l + 1], NHID, NHID)
        wh_list.append(w)
        bh_list.append(b)
    wh = jnp.stack(wh_list, axis=0)            # [NDEPTH-2, NHID, NHID]
    bh = jnp.stack(bh_list, axis=0)            # [NDEPTH-2, NHID, 1]

    wo, bo = lin(ks[4], ks[5], NHID, NLATENT)
    return w1, b1, wh, bh, wo, bo


def forward_reference(x, params):
    """Pure-JAX reference mirroring the torch MLP (x @ W^T + b, Softplus)."""
    w1, b1, wh, bh, wo, bo = params
    h = _softplus(x @ w1.T + b1[:, 0])
    for l in range(NDEPTH - 2):
        h = _softplus(h @ wh[l].T + bh[l][:, 0])
    return h @ wo.T + bo[:, 0]


if __name__ == "__main__":
    key = jax.random.PRNGKey(0)
    k_param, k_x1, k_x2 = jax.random.split(key, 3)

    params = init_params(k_param)

    # Aligned batch: 256 rows -> 2 grid steps of 128 lanes (both v7x TCs active).
    B = 256
    x = jax.random.normal(k_x1, (B, NLATENT), jnp.float32)
    out = jax.block_until_ready(forward(x, params))
    ref = forward_reference(x, params)
    assert out.shape == (B, NLATENT), out.shape
    assert jnp.allclose(out, ref, atol=1e-4, rtol=1e-4), "mismatch vs reference (aligned)"

    # Ragged batch: exercises the zero-pad + slice path.
    B2 = 200
    x2 = jax.random.normal(k_x2, (B2, NLATENT), jnp.float32)
    out2 = jax.block_until_ready(forward(x2, params))
    ref2 = forward_reference(x2, params)
    assert out2.shape == (B2, NLATENT), out2.shape
    assert jnp.allclose(out2, ref2, atol=1e-4, rtol=1e-4), "mismatch vs reference (ragged)"

    print("KERNEL_OK")
</pallas_src>

<mosaic_0001>
module attributes {stable_mosaic.version = 11 : i64} {
  func.func @_mlp_kernel(%arg0: i32, %arg1: memref<20x128xf32, #tpu.memory_space<vmem>>, %arg2: memref<32x20xf32, #tpu.memory_space<vmem>>, %arg3: memref<32x1xf32, #tpu.memory_space<vmem>>, %arg4: memref<1x32x32xf32, #tpu.memory_space<vmem>>, %arg5: memref<1x32x1xf32, #tpu.memory_space<vmem>>, %arg6: memref<20x32xf32, #tpu.memory_space<vmem>>, %arg7: memref<20x1xf32, #tpu.memory_space<vmem>>, %arg8: memref<20x128xf32, #tpu.memory_space<vmem>>) attributes {dimension_semantics = [#tpu.dimension_semantics<parallel>], iteration_bounds = array<i64: 2>, scalar_prefetch = 0 : i64, scratch_operands = 0 : i64, tpu.core_type = #tpu.core_type<tc>, window_params = [{transform_indices = @transform_0, window_bounds = array<i64: 20, 128>}, {pipeline_mode = #tpu.pipeline_mode<synchronous>, transform_indices = @transform_1, window_bounds = array<i64: 32, 20>}, {pipeline_mode = #tpu.pipeline_mode<synchronous>, transform_indices = @transform_2, window_bounds = array<i64: 32, 1>}, {pipeline_mode = #tpu.pipeline_mode<synchronous>, transform_indices = @transform_3, window_bounds = array<i64: 1, 32, 32>}, {pipeline_mode = #tpu.pipeline_mode<synchronous>, transform_indices = @transform_4, window_bounds = array<i64: 1, 32, 1>}, {pipeline_mode = #tpu.pipeline_mode<synchronous>, transform_indices = @transform_5, window_bounds = array<i64: 20, 32>}, {pipeline_mode = #tpu.pipeline_mode<synchronous>, transform_indices = @transform_6, window_bounds = array<i64: 20, 1>}, {transform_indices = @transform_7, window_bounds = array<i64: 20, 128>}]} {
    %c0 = arith.constant 0 : index
    %c0_0 = arith.constant 0 : index
    %0 = vector.load %arg2[%c0, %c0_0] : memref<32x20xf32, #tpu.memory_space<vmem>>, vector<32x20xf32>
    %c0_1 = arith.constant 0 : index
    %c0_2 = arith.constant 0 : index
    %1 = vector.load %arg1[%c0_1, %c0_2] : memref<20x128xf32, #tpu.memory_space<vmem>>, vector<20x128xf32>
    %cst = arith.constant dense<0.000000e+00> : vector<32x128xf32>
    %2 = tpu.matmul %0, %1, %cst {dimension_numbers = #tpu.dot_dimension_numbers<[1], [0], [0], [1], [0, 0, 1, 1], [], []>} : vector<32x20xf32>, vector<20x128xf32>, vector<32x128xf32> -> vector<32x128xf32>
    %c0_3 = arith.constant 0 : index
    %c0_4 = arith.constant 0 : index
    %3 = vector.load %arg3[%c0_3, %c0_4] : memref<32x1xf32, #tpu.memory_space<vmem>>, vector<32x1xf32>
    %4 = vector.broadcast %3 : vector<32x1xf32> to vector<32x128xf32>
    %5 = arith.addf %2, %4 : vector<32x128xf32>
    %cst_5 = arith.constant 0.000000e+00 : f32
    %6 = vector.broadcast %cst_5 : f32 to vector<32x128xf32>
    %7 = arith.maximumf %5, %6 : vector<32x128xf32>
    %8 = math.absf %5 : vector<32x128xf32>
    %cst_6 = arith.constant 0.000000e+00 : f32
    %9 = vector.broadcast %cst_6 : f32 to vector<32x128xf32>
    %10 = arith.subf %9, %8 : vector<32x128xf32>
    %11 = math.exp %10 : vector<32x128xf32>
    %cst_7 = arith.constant 1.000000e+00 : f32
    %12 = vector.broadcast %cst_7 : f32 to vector<32x128xf32>
    %13 = arith.addf %12, %11 : vector<32x128xf32>
    %14 = math.log %13 : vector<32x128xf32>
    %15 = arith.addf %7, %14 : vector<32x128xf32>
    %c0_8 = arith.constant 0 : index
    %c0_9 = arith.constant 0 : index
    %c0_10 = arith.constant 0 : index
    %16 = vector.load %arg4[%c0_8, %c0_9, %c0_10] : memref<1x32x32xf32, #tpu.memory_space<vmem>>, vector<1x32x32xf32>
    %17 = vector.shape_cast %16 : vector<1x32x32xf32> to vector<32x32xf32>
    %cst_11 = arith.constant dense<0.000000e+00> : vector<32x128xf32>
    %18 = tpu.matmul %17, %15, %cst_11 {dimension_numbers = #tpu.dot_dimension_numbers<[1], [0], [0], [1], [0, 0, 1, 1], [], []>} : vector<32x32xf32>, vector<32x128xf32>, vector<32x128xf32> -> vector<32x128xf32>
    %c0_12 = arith.constant 0 : index
    %c0_13 = arith.constant 0 : index
    %c0_14 = arith.constant 0 : index
    %19 = vector.load %arg5[%c0_12, %c0_13, %c0_14] : memref<1x32x1xf32, #tpu.memory_space<vmem>>, vector<1x32x1xf32>
    %20 = vector.shape_cast %19 : vector<1x32x1xf32> to vector<32x1xf32>
    %21 = vector.broadcast %20 : vector<32x1xf32> to vector<32x128xf32>
    %22 = arith.addf %18, %21 : vector<32x128xf32>
    %cst_15 = arith.constant 0.000000e+00 : f32
    %23 = vector.broadcast %cst_15 : f32 to vector<32x128xf32>
    %24 = arith.maximumf %22, %23 : vector<32x128xf32>
    %25 = math.absf %22 : vector<32x128xf32>
    %cst_16 = arith.constant 0.000000e+00 : f32
    %26 = vector.broadcast %cst_16 : f32 to vector<32x128xf32>
    %27 = arith.subf %26, %25 : vector<32x128xf32>
    %28 = math.exp %27 : vector<32x128xf32>
    %cst_17 = arith.constant 1.000000e+00 : f32
    %29 = vector.broadcast %cst_17 : f32 to vector<32x128xf32>
    %30 = arith.addf %29, %28 : vector<32x128xf32>
    %31 = math.log %30 : vector<32x128xf32>
    %32 = arith.addf %24, %31 : vector<32x128xf32>
    %c0_18 = arith.constant 0 : index
    %c0_19 = arith.constant 0 : index
    %33 = vector.load %arg6[%c0_18, %c0_19] : memref<20x32xf32, #tpu.memory_space<vmem>>, vector<20x32xf32>
    %cst_20 = arith.constant dense<0.000000e+00> : vector<20x128xf32>
    %34 = tpu.matmul %33, %32, %cst_20 {dimension_numbers = #tpu.dot_dimension_numbers<[1], [0], [0], [1], [0, 0, 1, 1], [], []>} : vector<20x32xf32>, vector<32x128xf32>, vector<20x128xf32> -> vector<20x128xf32>
    %c0_21 = arith.constant 0 : index
    %c0_22 = arith.constant 0 : index
    %35 = vector.load %arg7[%c0_21, %c0_22] : memref<20x1xf32, #tpu.memory_space<vmem>>, vector<20x1xf32>
    %36 = vector.broadcast %35 : vector<20x1xf32> to vector<20x128xf32>
    %37 = arith.addf %34, %36 : vector<20x128xf32>
    %c0_23 = arith.constant 0 : index
    %c0_24 = arith.constant 0 : index
    %38 = vector.load %arg8[%c0_23, %c0_24] : memref<20x128xf32, #tpu.memory_space<vmem>>, vector<20x128xf32>
    tpu.vector_store %arg8[%c0_23, %c0_24], %37 {strides = array<i32>} : memref<20x128xf32, #tpu.memory_space<vmem>>, vector<20x128xf32>,
    return
  }
  func.func @transform_0(%arg0: i32) -> (i32, i32) {
    %c0_i32 = arith.constant 0 : i32
    %c0_i32_0 = arith.constant 0 : i32
    return %c0_i32, %arg0 : i32, i32
  }
  func.func @transform_1(%arg0: i32) -> (i32, i32) {
    %c0_i32 = arith.constant 0 : i32
    %c0_i32_0 = arith.constant 0 : i32
    %c0_i32_1 = arith.constant 0 : i32
    return %c0_i32, %c0_i32_0 : i32, i32
  }
  func.func @transform_2(%arg0: i32) -> (i32, i32) {
    %c0_i32 = arith.constant 0 : i32
    %c0_i32_0 = arith.constant 0 : i32
    %c0_i32_1 = arith.constant 0 : i32
    return %c0_i32, %c0_i32_0 : i32, i32
  }
  func.func @transform_3(%arg0: i32) -> (i32, i32, i32) {
    %c0_i32 = arith.constant 0 : i32
    %c0_i32_0 = arith.constant 0 : i32
    %c0_i32_1 = arith.constant 0 : i32
    %c0_i32_2 = arith.constant 0 : i32
    return %c0_i32, %c0_i32_0, %c0_i32_1 : i32, i32, i32
  }
  func.func @transform_4(%arg0: i32) -> (i32, i32, i32) {
    %c0_i32 = arith.constant 0 : i32
    %c0_i32_0 = arith.constant 0 : i32
    %c0_i32_1 = arith.constant 0 : i32
    %c0_i32_2 = arith.constant 0 : i32
    return %c0_i32, %c0_i32_0, %c0_i32_1 : i32, i32, i32
  }
  func.func @transform_5(%arg0: i32) -> (i32, i32) {
    %c0_i32 = arith.constant 0 : i32
    %c0_i32_0 = arith.constant 0 : i32
    %c0_i32_1 = arith.constant 0 : i32
    return %c0_i32, %c0_i32_0 : i32, i32
  }
  func.func @transform_6(%arg0: i32) -> (i32, i32) {
    %c0_i32 = arith.constant 0 : i32
    %c0_i32_0 = arith.constant 0 : i32
    %c0_i32_1 = arith.constant 0 : i32
    return %c0_i32, %c0_i32_0 : i32, i32
  }
  func.func @transform_7(%arg0: i32) -> (i32, i32) {
    %c0_i32 = arith.constant 0 : i32
    %c0_i32_0 = arith.constant 0 : i32
    return %c0_i32, %arg0 : i32, i32
  }
}

</mosaic_0001>

<llo_original>
// kernel: tpu_custom_call.1
$region0: #{tpu_custom_call.1}
  #allocation0 [shape = 'u32[]', space=smem, size = 0x4, offset = 0x4, fixed_abs, tag = 'smem constant byte address 0x4 - core index']
  #allocation1 [shape = 'u32[144,128]{1,0:T(1,128)}', space=vmem, size = 0x12000, scoped, tag = 'internal scratch']
  %s0 = inlined_call_operand.vmem [shape: f32[20,256], index: 0, kind: input, shape index: {}]
  %s1 = inlined_call_operand.vmem [shape: f32[32,20], index: 1, kind: input, shape index: {}]
  %s2 = inlined_call_operand.vmem [shape: f32[32,1], index: 2, kind: input, shape index: {}]
  %s3 = inlined_call_operand.vmem [shape: f32[1,32,32], index: 3, kind: input, shape index: {}]
  %s4 = inlined_call_operand.vmem [shape: f32[1,32,1], index: 4, kind: input, shape index: {}]
  %s5 = inlined_call_operand.vmem [shape: f32[20,32], index: 5, kind: input, shape index: {}]
  %s6 = inlined_call_operand.vmem [shape: f32[20,1], index: 6, kind: input, shape index: {}]
  %s7 = inlined_call_operand.hbm [shape: f32[20,256], index: 7, kind: output, shape index: {}]
  %s8 = sld [smem:[#allocation0]]
  $region99: #{tpu_custom_call.1} parent=0
    _
  %s10 = ssub.s32 1, %s8
  %s11 = scalar_select 0, %s10, %s8
  $region1: #{tpu_custom_call.1} parent=0
    #allocation2 [shape = 'u8[24576]{0}', space=vmem, size = 0x6000, scoped, tag = 'input window, operand 0']
    #allocation3 [shape = 'u8[24576]{0}', space=vmem, size = 0x6000, scoped, tag = 'output window, operand 0']
    #allocation4 [shape = 's32[2]{0}', space=sflag, size = 0x8, scoped, tag = 'scoped memory for tpu_custom_call.1']
    %12 = vsyncpa [#allocation4], 0
    %s13 = scalar_lea.sflag [#allocation4], 1
    %14 = vsyncpa %s13, 0
    loop: start=0, step=1, limit=4
    $region2: #{tpu_custom_call.1} parent=1 // loop_pre_header
      _
    $region3: #{tpu_custom_call.1} parent=1 // loop_header
      %s16 = sphi 0, %s20
      %p17 = scmp.ge.s32.totalorder %s16, 4
      %s26 = sphi 0, %s28
      %s29 = sphi 0, %s26
      %s30 = sphi 0, %s29
      %s46 = sphi 0, %s30
      %s50 = sphi 0, %s50
      %s52 = sphi 0, %s50
      %s53 = sphi 0, %s52
      %s67 = sphi 0, %s53
      %s71 = sphi 0, %s71
      %s73 = sphi 0, %s71
      %s74 = sphi 0, %s73
      %s88 = sphi 0, %s74
      %s92 = sphi 0, %s92
      %s94 = sphi 0, %s92
      %s95 = sphi 0, %s94
      %s109 = sphi 0, %s95
      %s113 = sphi 0, %s113
      %s115 = sphi 0, %s113
      %s116 = sphi 0, %s115
      %s130 = sphi 0, %s116
      %s134 = sphi 0, %s134
      %s136 = sphi 0, %s134
      %s137 = sphi 0, %s136
      %s151 = sphi 0, %s137
      %s155 = sphi 0, %s155
      %s157 = sphi 0, %s155
      %s158 = sphi 0, %s157
      %s172 = sphi 0, %s158
      %s178 = sphi 0, %s180
      %s181 = sphi 0, %s178
      %s182 = sphi 0, %s181
      %s198 = sphi 0, %s182
    $region4: #{tpu_custom_call.1} parent=1 // loop_header_branch
      %19 = sbr.rel (%p17) target = $region8
    $region5: #{tpu_custom_call.1} parent=1 // loop_body
      %s21 = ssub.s32 %s16, 1
      %s22 = ssub.s32 %s16, 2
      %s23 = sadd.s32 %s16, 1
      %s24 = ssub.s32 %s16, %s23
      %p25 = scmp.eq.s32.totalorder %s24, 0
      %s27 = sadd.s32 %s26, 1
      %s28 = scalar_select %p25, %s26, %s27
      %p31 = pneg %p25
      %p32 = scmp.eq.s32.totalorder %s16, 1
      %p33 = por %p31, %p32
      %p34 = scmp.ne.s32.totalorder %s26, %s29
      %p35 = scmp.eq.s32.totalorder %s16, 0
      %p36 = por %p34, %p35
      %p37 = scmp.ne.s32.totalorder %s26, %s29
      %p38 = scmp.eq.s32.totalorder %s21, 1
      %p39 = por %p37, %p38
      %p40 = scmp.ne.s32.totalorder %s29, %s30
      %p41 = scmp.eq.s32.totalorder %s21, 0
      %p42 = por %p40, %p41
      %p43 = scmp.ne.s32.totalorder %s29, %s30
      %p44 = scmp.eq.s32.totalorder %s22, 1
      %p45 = por %p43, %p44
      %p47 = scmp.ne.s32.totalorder %s30, %s46
      %p48 = scmp.eq.s32.totalorder %s22, 0
      %p49 = por %p47, %p48
      %s51 = sadd.s32 %s50, 1
      %p54 = scmp.eq.s32.totalorder %s16, 1
      %p55 = scmp.ne.s32.totalorder %s50, %s52
      %p56 = scmp.eq.s32.totalorder %s16, 0
      %p57 = por %p55, %p56
      %p58 = scmp.ne.s32.totalorder %s50, %s52
      %p59 = scmp.eq.s32.totalorder %s21, 1
      %p60 = por %p58, %p59
      %p61 = scmp.ne.s32.totalorder %s52, %s53
      %p62 = scmp.eq.s32.totalorder %s21, 0
      %p63 = por %p61, %p62
      %p64 = scmp.ne.s32.totalorder %s52, %s53
      %p65 = scmp.eq.s32.totalorder %s22, 1
      %p66 = por %p64, %p65
      %p68 = scmp.ne.s32.totalorder %s53, %s67
      %p69 = scmp.eq.s32.totalorder %s22, 0
      %p70 = por %p68, %p69
      %s72 = sadd.s32 %s71, 1
      %p75 = scmp.eq.s32.totalorder %s16, 1
      %p76 = scmp.ne.s32.totalorder %s71, %s73
      %p77 = scmp.eq.s32.totalorder %s16, 0
      %p78 = por %p76, %p77
      %p79 = scmp.ne.s32.totalorder %s71, %s73
      %p80 = scmp.eq.s32.totalorder %s21, 1
      %p81 = por %p79, %p80
      %p82 = scmp.ne.s32.totalorder %s73, %s74
      %p83 = scmp.eq.s32.totalorder %s21, 0
      %p84 = por %p82, %p83
      %p85 = scmp.ne.s32.totalorder %s73, %s74
      %p86 = scmp.eq.s32.totalorder %s22, 1
      %p87 = por %p85, %p86
      %p89 = scmp.ne.s32.totalorder %s74, %s88
      %p90 = scmp.eq.s32.totalorder %s22, 0
      %p91 = por %p89, %p90
      %s93 = sadd.s32 %s92, 1
      %p96 = scmp.eq.s32.totalorder %s16, 1
      %p97 = scmp.ne.s32.totalorder %s92, %s94
      %p98 = scmp.eq.s32.totalorder %s16, 0
      %p99 = por %p97, %p98
      %p100 = scmp.ne.s32.totalorder %s92, %s94
      %p101 = scmp.eq.s32.totalorder %s21, 1
      %p102 = por %p100, %p101
      %p103 = scmp.ne.s32.totalorder %s94, %s95
      %p104 = scmp.eq.s32.totalorder %s21, 0
      %p105 = por %p103, %p104
      %p106 = scmp.ne.s32.totalorder %s94, %s95
      %p107 = scmp.eq.s32.totalorder %s22, 1
      %p108 = por %p106, %p107
      %p110 = scmp.ne.s32.totalorder %s95, %s109
      %p111 = scmp.eq.s32.totalorder %s22, 0
      %p112 = por %p110, %p111
      %s114 = sadd.s32 %s113, 1
      %p117 = scmp.eq.s32.totalorder %s16, 1
      %p118 = scmp.ne.s32.totalorder %s113, %s115
      %p119 = scmp.eq.s32.totalorder %s16, 0
      %p120 = por %p118, %p119
      %p121 = scmp.ne.s32.totalorder %s113, %s115
      %p122 = scmp.eq.s32.totalorder %s21, 1
      %p123 = por %p121, %p122
      %p124 = scmp.ne.s32.totalorder %s115, %s116
      %p125 = scmp.eq.s32.totalorder %s21, 0
      %p126 = por %p124, %p125
      %p127 = scmp.ne.s32.totalorder %s115, %s116
      %p128 = scmp.eq.s32.totalorder %s22, 1
      %p129 = por %p127, %p128
      %p131 = scmp.ne.s32.totalorder %s116, %s130
      %p132 = scmp.eq.s32.totalorder %s22, 0
      %p133 = por %p131, %p132
      %s135 = sadd.s32 %s134, 1
      %p138 = scmp.eq.s32.totalorder %s16, 1
      %p139 = scmp.ne.s32.totalorder %s134, %s136
      %p140 = scmp.eq.s32.totalorder %s16, 0
      %p141 = por %p139, %p140
      %p142 = scmp.ne.s32.totalorder %s134, %s136
      %p143 = scmp.eq.s32.totalorder %s21, 1
      %p144 = por %p142, %p143
      %p145 = scmp.ne.s32.totalorder %s136, %s137
      %p146 = scmp.eq.s32.totalorder %s21, 0
      %p147 = por %p145, %p146
      %p148 = scmp.ne.s32.totalorder %s136, %s137
      %p149 = scmp.eq.s32.totalorder %s22, 1
      %p150 = por %p148, %p149
      %p152 = scmp.ne.s32.totalorder %s137, %s151
      %p153 = scmp.eq.s32.totalorder %s22, 0
      %p154 = por %p152, %p153
      %s156 = sadd.s32 %s155, 1
      %p159 = scmp.eq.s32.totalorder %s16, 1
      %p160 = scmp.ne.s32.totalorder %s155, %s157
      %p161 = scmp.eq.s32.totalorder %s16, 0
      %p162 = por %p160, %p161
      %p163 = scmp.ne.s32.totalorder %s155, %s157
      %p164 = scmp.eq.s32.totalorder %s21, 1
      %p165 = por %p163, %p164
      %p166 = scmp.ne.s32.totalorder %s157, %s158
      %p167 = scmp.eq.s32.totalorder %s21, 0
      %p168 = por %p166, %p167
      %p169 = scmp.ne.s32.totalorder %s157, %s158
      %p170 = scmp.eq.s32.totalorder %s22, 1
      %p171 = por %p169, %p170
      %p173 = scmp.ne.s32.totalorder %s158, %s172
      %p174 = scmp.eq.s32.totalorder %s22, 0
      %p175 = por %p173, %p174
      %s176 = ssub.s32 %s16, %s23
      %p177 = scmp.eq.s32.totalorder %s176, 0
      %s179 = sadd.s32 %s178, 1
      %s180 = scalar_select %p177, %s178, %s179
      %p183 = pneg %p177
      %p184 = scmp.eq.s32.totalorder %s16, 1
      %p185 = por %p183, %p184
      %p186 = scmp.ne.s32.totalorder %s178, %s181
      %p187 = scmp.eq.s32.totalorder %s16, 0
      %p188 = por %p186, %p187
      %p189 = scmp.ne.s32.totalorder %s178, %s181
      %p190 = scmp.eq.s32.totalorder %s21, 1
      %p191 = por %p189, %p190
      %p192 = scmp.ne.s32.totalorder %s181, %s182
      %p193 = scmp.eq.s32.totalorder %s21, 0
      %p194 = por %p192, %p193
      %p195 = scmp.ne.s32.totalorder %s181, %s182
      %p196 = scmp.eq.s32.totalorder %s22, 1
      %p197 = por %p195, %p196
      %p199 = scmp.ne.s32.totalorder %s182, %s198
      %p200 = scmp.eq.s32.totalorder %s22, 0
      %p201 = por %p199, %p200
      %p202 = scmp.le.s32.totalorder 1, %s16
      %p203 = scmp.lt.s32.totalorder %s16, 3
      %p204 = pnand %p202, %p203
      %p205 = pneg %p204
      // Predicated region
      $region9: #{tpu_custom_call.1} parent=5 // pred_check
        _
      $region10: #{tpu_custom_call.1} parent=5 // pred_check_branch
        %207 = sbr.rel (%p204) target = $region12
      $region11: #{tpu_custom_call.1} parent=5 // pred_region
        %s208 = ssub.s32 %s16, 1
        // Predicated region
        $region13: #{tpu_custom_call.1} parent=11 // pred_check
          %p209 = pneg %p63
        $region14: #{tpu_custom_call.1} parent=11 // pred_check_branch
          %211 = sbr.rel (%p209) target = $region16
        $region15: #{tpu_custom_call.1} parent=11 // pred_region
          _
        $region16: #{tpu_custom_call.1} parent=11 // pred_fallthru
          _
        // Predicated region
        $region17: #{tpu_custom_call.1} parent=11 // pred_check
          %p212 = pneg %p84
        $region18: #{tpu_custom_call.1} parent=11 // pred_check_branch
          %214 = sbr.rel (%p212) target = $region20
        $region19: #{tpu_custom_call.1} parent=11 // pred_region
          _
        $region20: #{tpu_custom_call.1} parent=11 // pred_fallthru
          _
        // Predicated region
        $region21: #{tpu_custom_call.1} parent=11 // pred_check
          %p215 = pneg %p105
        $region22: #{tpu_custom_call.1} parent=11 // pred_check_branch
          %217 = sbr.rel (%p215) target = $region24
        $region23: #{tpu_custom_call.1} parent=11 // pred_region
          _
        $region24: #{tpu_custom_call.1} parent=11 // pred_fallthru
          _
        // Predicated region
        $region25: #{tpu_custom_call.1} parent=11 // pred_check
          %p218 = pneg %p126
        $region26: #{tpu_custom_call.1} parent=11 // pred_check_branch
          %220 = sbr.rel (%p218) target = $region28
        $region27: #{tpu_custom_call.1} parent=11 // pred_region
          _
        $region28: #{tpu_custom_call.1} parent=11 // pred_fallthru
          _
        // Predicated region
        $region29: #{tpu_custom_call.1} parent=11 // pred_check
          %p221 = pneg %p147
        $region30: #{tpu_custom_call.1} parent=11 // pred_check_branch
          %223 = sbr.rel (%p221) target = $region32
        $region31: #{tpu_custom_call.1} parent=11 // pred_region
          _
        $region32: #{tpu_custom_call.1} parent=11 // pred_fallthru
          _
        // Predicated region
        $region33: #{tpu_custom_call.1} parent=11 // pred_check
          %p224 = pneg %p168
        $region34: #{tpu_custom_call.1} parent=11 // pred_check_branch
          %226 = sbr.rel (%p224) target = $region36
        $region35: #{tpu_custom_call.1} parent=11 // pred_region
          _
        $region36: #{tpu_custom_call.1} parent=11 // pred_fallthru
          _
      $region12: #{tpu_custom_call.1} parent=5 // pred_fallthru
        _
      %p227 = scmp.lt.s32.totalorder %s16, 2
      // Predicated region
      $region37: #{tpu_custom_call.1} parent=5 // pred_check
        %p228 = pneg %p227
      $region38: #{tpu_custom_call.1} parent=5 // pred_check_branch
        %230 = sbr.rel (%p228) target = $region40
      $region39: #{tpu_custom_call.1} parent=5 // pred_region
        // Predicated region
        $region41: #{tpu_custom_call.1} parent=39 // pred_check
          %p231 = pneg %p36
        $region42: #{tpu_custom_call.1} parent=39 // pred_check_branch
          %233 = sbr.rel (%p231) target = $region44
        $region43: #{tpu_custom_call.1} parent=39 // pred_region
          %s234 = sand.u32 %s26, 1
          %s235 = sand.u32 %s26, 1
          %s236 = smul.addr %s235, 24
          %s237 = scalar_lea.vmem [#allocation2], %s236
          %s238 = smul.addr %s16, 8
          %s239 = scalar_lea.vmem %s0, %s238
          // Predicated region
          $region45: #{tpu_custom_call.1} parent=43 // pred_check
            _
          $region46: #{tpu_custom_call.1} parent=43 // pred_check_branch
            %241 = sbr.rel (0) target = $region48
          $region47: #{tpu_custom_call.1} parent=43 // pred_region
            // Predicated region
            $region49: #{tpu_custom_call.1} parent=47 // pred_check
              _
            $region50: #{tpu_custom_call.1} parent=47 // pred_check_branch
              %243 = sbr.rel (0) target = $region52
            $region51: #{tpu_custom_call.1} parent=47 // pred_region
              // Predicated region
              $region64: #{tpu_custom_call.1} parent=51 // pred_check
                _
              $region65: #{tpu_custom_call.1} parent=51 // pred_check_branch
                %263 = sbr.rel (0) target = $region67
              $region66: #{tpu_custom_call.1} parent=51 // pred_region
                loop: start=0, step=1, limit=1
                $region68: #{tpu_custom_call.1} parent=66 // loop_pre_header
                  _
                $region69: #{tpu_custom_call.1} parent=66 // loop_header
                  %s265 = sphi 0, %s269
                  %p266 = scmp.ge.s32.totalorder %s265, 1
                  %s270 = sphi %s239, %s239
                  %s271 = sphi %s237, %s237
                $region70: #{tpu_custom_call.1} parent=66 // loop_header_branch
                  %268 = sbr.rel (%p266) target = $region74
                $region71: #{tpu_custom_call.1} parent=66 // loop_body
                  %v272 = vld [vmem:[%s270] sm:$0xff]
                  %273 = vst [vmem:[%s271] sm:$0xff] %v272
                  %v274 = vld [vmem:[%s270 + $0x10] sm:$0xff]
                  %275 = vst [vmem:[%s271 + $0x8] sm:$0xff] %v274
                  %v276 = vld [vmem:[%s270 + $0x20] sm:$0xff]
                  %277 = vst [vmem:[%s271 + $0x10] sm:$0xff] %v276
                $region72: #{tpu_custom_call.1} parent=66 // loop_footer
                  %s269 = sadd.s32 1, %s265
                $region73: #{tpu_custom_call.1} parent=66 // loop_footer_branch
                  %264 = sbr.rel target = $region69
                $region74: #{tpu_custom_call.1} parent=66 // loop_exit
                  _
              $region67: #{tpu_custom_call.1} parent=51 // pred_fallthru
                _
              // Predicated region
              $region75: #{tpu_custom_call.1} parent=51 // pred_check
                _
              $region76: #{tpu_custom_call.1} parent=51 // pred_check_branch
                %279 = sbr.rel target = $region78
              $region77: #{tpu_custom_call.1} parent=51 // pred_region
                _
              $region78: #{tpu_custom_call.1} parent=51 // pred_fallthru
                _
            $region52: #{tpu_custom_call.1} parent=47 // pred_fallthru
              _
            // Predicated region
            $region53: #{tpu_custom_call.1} parent=47 // pred_check
              _
            $region54: #{tpu_custom_call.1} parent=47 // pred_check_branch
              %245 = sbr.rel target = $region56
            $region55: #{tpu_custom_call.1} parent=47 // pred_region
              %s247 = ssub.s32 256, 1
              loop: start=0, step=1, limit=1
              $region57: #{tpu_custom_call.1} parent=55 // loop_pre_header
                _
              $region58: #{tpu_custom_call.1} parent=55 // loop_header
                %s249 = sphi 0, %s253
                %p250 = scmp.ge.s32.totalorder %s249, 1
                %s254 = sphi %s239, %s239
                %s255 = sphi %s237, %s237
              $region59: #{tpu_custom_call.1} parent=55 // loop_header_branch
                %252 = sbr.rel (%p250) target = $region63
              $region60: #{tpu_custom_call.1} parent=55 // loop_body
                %v256 = vld [vmem:[%s254] sm:%s247]
                %257 = vst [vmem:[%s255] sm:%s247] %v256
                %v258 = vld [vmem:[%s254 + $0x10] sm:%s247]
                %259 = vst [vmem:[%s255 + $0x8] sm:%s247] %v258
                %v260 = vld [vmem:[%s254 + $0x20] sm:%s247]
                %261 = vst [vmem:[%s255 + $0x10] sm:%s247] %v260
              $region61: #{tpu_custom_call.1} parent=55 // loop_footer
                %s253 = sadd.s32 1, %s249
              $region62: #{tpu_custom_call.1} parent=55 // loop_footer_branch
                %248 = sbr.rel target = $region58
              $region63: #{tpu_custom_call.1} parent=55 // loop_exit
                _
            $region56: #{tpu_custom_call.1} parent=47 // pred_fallthru
              _
          $region48: #{tpu_custom_call.1} parent=43 // pred_fallthru
            _
          %280 = vnop
        $region44: #{tpu_custom_call.1} parent=39 // pred_fallthru
          _
      $region40: #{tpu_custom_call.1} parent=5 // pred_fallthru
        _
      %p281 = scmp.le.s32.totalorder 1, %s16
      %p282 = scmp.lt.s32.totalorder %s16, 3
      %p283 = pnand %p281, %p282
      %p284 = pneg %p283
      // Predicated region
      $region79: #{tpu_custom_call.1} parent=5 // pred_check
        _
      $region80: #{tpu_custom_call.1} parent=5 // pred_check_branch
        %286 = sbr.rel (%p283) target = $region82
      $region81: #{tpu_custom_call.1} parent=5 // pred_region
        %s287 = ssub.s32 %s16, 1
        %s288 = sand.u32 %s29, 1
        %s289 = sand.u32 %s29, 1
        %s290 = smul.addr %s289, 24
        %s291 = scalar_lea.vmem [#allocation2], %s290
        // Predicated region
        $region83: #{tpu_custom_call.1} parent=81 // pred_check
          %p292 = pneg %p42
        $region84: #{tpu_custom_call.1} parent=81 // pred_check_branch
          %294 = sbr.rel (%p292) target = $region86
        $region85: #{tpu_custom_call.1} parent=81 // pred_region
          _
        $region86: #{tpu_custom_call.1} parent=81 // pred_fallthru
          _
        %s295 = sand.u32 %s29, 1
        %s296 = sand.u32 %s29, 1
        %s297 = smul.addr %s296, 24
        %s298 = scalar_lea.vmem [#allocation2], %s297
        %p299 = pneg %p42
        %p300 = pneg %p39
        %p301 = pneg %p63
        %p302 = pneg %p60
        %p303 = pneg %p84
        %p304 = pneg %p81
        %p305 = pneg %p105
        %p306 = pneg %p102
        %p307 = pneg %p126
        %p308 = pneg %p123
        %p309 = pneg %p147
        %p310 = pneg %p144
        %p311 = pneg %p168
        %p312 = pneg %p165
        %p313 = pneg %p194
        %p314 = pneg %p191
        %s315 = sand.u32 %s181, 1
        %s316 = scalar_lea.sflag [#allocation4], %s315
        %s317 = sand.u32 %s181, 1
        %s318 = smul.addr %s317, 24
        %s319 = scalar_lea.vmem [#allocation3], %s318
        %v320 = vld [vmem:[%s1] sm:$0xff]
        %v321 = vld [vmem:[%s1 + $0x8] sm:$0xff]
        %v322 = vld [vmem:[%s1 + $0x10] sm:$0xff]
        %v323 = vld [vmem:[%s1 + $0x18] sm:$0xff]
        %v324 = vld [vmem:[%s291] sm:$0xff]
        %v325 = vld [vmem:[%s291 + $0x8] sm:$0xff]
        %v326 = vld [vmem:[%s291 + $0x10] sm:$0xf]
        %v327 = vld [vmem:[%s2] sm:$0xff]
        %v328 = vld [vmem:[%s2 + $0x8] sm:$0xff]
        %v329 = vld [vmem:[%s2 + $0x10] sm:$0xff]
        %v330 = vld [vmem:[%s2 + $0x18] sm:$0xff]
        %332 = vset.pattern.permute.xlu0 0
        %333 = vperm.xlu0 %332, %v327
        %v334 = vpop.permute.xlu0 %333
        %337 = vset.pattern.permute.xlu0 0
        %338 = vperm.xlu0 %337, %v328
        %v339 = vpop.permute.xlu0 %338
        %342 = vset.pattern.permute.xlu0 0
        %343 = vperm.xlu0 %342, %v329
        %v344 = vpop.permute.xlu0 %343
        %347 = vset.pattern.permute.xlu0 0
        %348 = vperm.xlu0 %347, %v330
        %v349 = vpop.permute.xlu0 %348
        %vm351 = vcmask 162816
        %v353 = vsel %vm351, %v320, 0
        %v356 = vsel %vm351, %v321, 0
        %v359 = vsel %vm351, %v322, 0
        %v362 = vsel %vm351, %v323, 0
        %vm364 = vcmask 1043456
        %v366 = vsel %vm364, %v326, 0
        %368 = vmatprep.subr.mxu0 0.0
        %369 = vmatpush1.msra.mxu0 0.0
        %370 = vmatprep.subr.mxu0 0.0
        %371 = vmatpush1.msra.mxu0 0.0
        %372 = vmatprep.subr.mxu0 0.0
        %373 = vmatpush1.msra.mxu0 0.0
        %374 = vmatprep.subr.mxu0 0.0
        %375 = vmatpush1.msra.mxu0 0.0
        %376 = vmatprep.subr.mxu0 0.0
        %377 = vmatpush1.msra.mxu0 0.0
        %378 = vmatprep.subr.mxu0 0.0
        %379 = vmatpush1.msra.mxu0 0.0
        %380 = vmatprep.subr.mxu0 0.0
        %381 = vmatpush1.msra.mxu0 0.0
        %382 = vmatprep.subr.mxu0 0.0
        %383 = vmatpush1.msra.mxu0 0.0
        %384 = vmatprep.subr.mxu0 0.0
        %385 = vmatpush1.msra.mxu0 0.0
        %386 = vmatprep.subr.mxu0 0.0
        %387 = vmatpush1.msra.mxu0 0.0
        %388 = vmatprep.subr.mxu0 0.0
        %389 = vmatpush1.msra.mxu0 0.0
        %390 = vmatprep.subr.mxu0 0.0
        %391 = vmatpush1.msra.mxu0 0.0
        %392 = vmatprep.subr.mxu0 0.0
        %393 = vmatpush1.msra.mxu0 0.0
        %394 = vmatprep.subr.mxu0 0.0
        %395 = vmatpush1.msra.mxu0 %v366
        %396 = vmatprep.subr.mxu0 0.0
        %397 = vmatpush1.msra.mxu0 %v325
        %398 = vmatprep.subr.mxu0 0.0
        %399 = vmatpush1.msra.mxu0 %v324
        %400 = vmatprep.subr.mxu0 0.0
        %401 = vmatpush2.msra.mxu0 0.0
        %402 = vmatprep.subr.mxu0 0.0
        %403 = vmatpush2.msra.mxu0 0.0
        %404 = vmatprep.subr.mxu0 0.0
        %405 = vmatpush2.msra.mxu0 0.0
        %406 = vmatprep.subr.mxu0 0.0
        %407 = vmatpush2.msra.mxu0 0.0
        %408 = vmatprep.subr.mxu0 0.0
        %409 = vmatpush2.msra.mxu0 0.0
        %410 = vmatprep.subr.mxu0 0.0
        %411 = vmatpush2.msra.mxu0 0.0
        %412 = vmatprep.subr.mxu0 0.0
        %413 = vmatpush2.msra.mxu0 0.0
        %414 = vmatprep.subr.mxu0 0.0
        %415 = vmatpush2.msra.mxu0 0.0
        %416 = vmatprep.subr.mxu0 0.0
        %417 = vmatpush2.msra.mxu0 0.0
        %418 = vmatprep.subr.mxu0 0.0
        %419 = vmatpush2.msra.mxu0 0.0
        %420 = vmatprep.subr.mxu0 0.0
        %421 = vmatpush2.msra.mxu0 0.0
        %422 = vmatprep.subr.mxu0 0.0
        %423 = vmatpush2.msra.mxu0 0.0
        %424 = vmatprep.subr.mxu0 0.0
        %425 = vmatpush2.msra.mxu0 0.0
        %426 = vmatprep.subr.mxu0 0.0
        %427 = vmatpush2.msra.mxu0 0.0
        %428 = vmatprep.subr.mxu0 0.0
        %429 = vmatpush2.msra.mxu0 0.0
        %430 = vmatprep.subr.mxu0 0.0
        %431 = vmatpush2.msra.mxu0 0.0
        %432 = vmatprep.mubr.f32.mxu0 0.0
        %433 = vmatmul.mubr.f32.gmra.mxu0 %v353
        %v434 = vpop.f32.mrf.mxu0
        %v435 = vadd.f32 %v334, %v434
        %v436 = vpop.f32.mrf.mxu0
        %437 = vmatprep.mubr.f32.mxu0 0.0
        %438 = vmatmul.mubr.f32.gmra.mxu0 %v356
        %v439 = vpop.f32.mrf.mxu0
        %v440 = vadd.f32 %v339, %v439
        %v441 = vpop.f32.mrf.mxu0
        %442 = vmatprep.mubr.f32.mxu0 0.0
        %443 = vmatmul.mubr.f32.gmra.mxu0 %v359
        %v444 = vpop.f32.mrf.mxu0
        %v445 = vadd.f32 %v344, %v444
        %v446 = vpop.f32.mrf.mxu0
        %447 = vmatprep.mubr.f32.mxu0 0.0
        %448 = vmatmul.mubr.f32.gmra.mxu0 %v362
        %v449 = vpop.f32.mrf.mxu0
        %v450 = vadd.f32 %v349, %v449
        %v451 = vpop.f32.mrf.mxu0
        %452 = vdwg.mxu0
        %v453 = vmax.f32 %v435, 0.0
        %v454 = vmax.f32 %v440, 0.0
        %v455 = vmax.f32 %v445, 0.0
        %v456 = vmax.f32 %v450, 0.0
        %v457 = vand.u32 2147483647, %v435
        %v458 = vand.u32 2147483647, %v440
        %v459 = vand.u32 2147483647, %v445
        %v460 = vand.u32 2147483647, %v450
        %v461 = vsub.f32 0.0, %v457
        %v462 = vsub.f32 0.0, %v458
        %v463 = vsub.f32 0.0, %v459
        %v464 = vsub.f32 0.0, %v460
        %v465 = vmul.f32 %v461, 1.442695
        %v466 = vpow.pop %v465
        %v467 = vmul.f32 %v462, 1.442695
        %v468 = vpow.pop %v467
        %v469 = vmul.f32 %v463, 1.442695
        %v470 = vpow.pop %v469
        %v471 = vmul.f32 %v464, 1.442695
        %v472 = vpow.pop %v471
        %v473 = vadd.f32 %v466, 1.0
        %v474 = vadd.f32 %v468, 1.0
        %v475 = vadd.f32 %v470, 1.0
        %v476 = vadd.f32 %v472, 1.0
        %v477 = vlog2.pop %v473
        %v478 = vmul.f32 %v477, 0.6931472
        %v479 = vlog2.pop %v474
        %v480 = vmul.f32 %v479, 0.6931472
        %v481 = vlog2.pop %v475
        %v482 = vmul.f32 %v481, 0.6931472
        %v483 = vlog2.pop %v476
        %v484 = vmul.f32 %v483, 0.6931472
        %v485 = vadd.f32 %v453, %v478
        %v486 = vadd.f32 %v454, %v480
        %v487 = vadd.f32 %v455, %v482
        %v488 = vadd.f32 %v456, %v484
        %v489 = vld [vmem:[%s3] sm:$0xff]
        %v490 = vld [vmem:[%s3 + $0x8] sm:$0xff]
        %v491 = vld [vmem:[%s3 + $0x10] sm:$0xff]
        %v492 = vld [vmem:[%s3 + $0x18] sm:$0xff]
        %v493 = vld [vmem:[%s4] sm:$0xff]
        %v494 = vld [vmem:[%s4 + $0x8] sm:$0xff]
        %v495 = vld [vmem:[%s4 + $0x10] sm:$0xff]
        %v496 = vld [vmem:[%s4 + $0x18] sm:$0xff]
        %498 = vset.pattern.permute.xlu0 0
        %499 = vperm.xlu0 %498, %v493
        %v500 = vpop.permute.xlu0 %499
        %503 = vset.pattern.permute.xlu0 0
        %504 = vperm.xlu0 %503, %v494
        %v505 = vpop.permute.xlu0 %504
        %508 = vset.pattern.permute.xlu0 0
        %509 = vperm.xlu0 %508, %v495
        %v510 = vpop.permute.xlu0 %509
        %513 = vset.pattern.permute.xlu0 0
        %514 = vperm.xlu0 %513, %v496
        %v515 = vpop.permute.xlu0 %514
        %vm517 = vcmask 261120
        %v519 = vsel %vm517, %v489, 0
        %v522 = vsel %vm517, %v490, 0
        %v525 = vsel %vm517, %v491, 0
        %v528 = vsel %vm517, %v492, 0
        %530 = vmatprep.subr.mxu0 0.0
        %531 = vmatpush1.msra.mxu0 0.0
        %532 = vmatprep.subr.mxu0 0.0
        %533 = vmatpush1.msra.mxu0 0.0
        %534 = vmatprep.subr.mxu0 0.0
        %535 = vmatpush1.msra.mxu0 0.0
        %536 = vmatprep.subr.mxu0 0.0
        %537 = vmatpush1.msra.mxu0 0.0
        %538 = vmatprep.subr.mxu0 0.0
        %539 = vmatpush1.msra.mxu0 0.0
        %540 = vmatprep.subr.mxu0 0.0
        %541 = vmatpush1.msra.mxu0 0.0
        %542 = vmatprep.subr.mxu0 0.0
        %543 = vmatpush1.msra.mxu0 0.0
        %544 = vmatprep.subr.mxu0 0.0
        %545 = vmatpush1.msra.mxu0 0.0
        %546 = vmatprep.subr.mxu0 0.0
        %547 = vmatpush1.msra.mxu0 0.0
        %548 = vmatprep.subr.mxu0 0.0
        %549 = vmatpush1.msra.mxu0 0.0
        %550 = vmatprep.subr.mxu0 0.0
        %551 = vmatpush1.msra.mxu0 0.0
        %552 = vmatprep.subr.mxu0 0.0
        %553 = vmatpush1.msra.mxu0 0.0
        %554 = vmatprep.subr.mxu0 0.0
        %555 = vmatpush1.msra.mxu0 %v488
        %556 = vmatprep.subr.mxu0 0.0
        %557 = vmatpush1.msra.mxu0 %v487
        %558 = vmatprep.subr.mxu0 0.0
        %559 = vmatpush1.msra.mxu0 %v486
        %560 = vmatprep.subr.mxu0 0.0
        %561 = vmatpush1.msra.mxu0 %v485
        %562 = vmatprep.subr.mxu0 0.0
        %563 = vmatpush2.msra.mxu0 0.0
        %564 = vmatprep.subr.mxu0 0.0
        %565 = vmatpush2.msra.mxu0 0.0
        %566 = vmatprep.subr.mxu0 0.0
        %567 = vmatpush2.msra.mxu0 0.0
        %568 = vmatprep.subr.mxu0 0.0
        %569 = vmatpush2.msra.mxu0 0.0
        %570 = vmatprep.subr.mxu0 0.0
        %571 = vmatpush2.msra.mxu0 0.0
        %572 = vmatprep.subr.mxu0 0.0
        %573 = vmatpush2.msra.mxu0 0.0
        %574 = vmatprep.subr.mxu0 0.0
        %575 = vmatpush2.msra.mxu0 0.0
        %576 = vmatprep.subr.mxu0 0.0
        %577 = vmatpush2.msra.mxu0 0.0
        %578 = vmatprep.subr.mxu0 0.0
        %579 = vmatpush2.msra.mxu0 0.0
        %580 = vmatprep.subr.mxu0 0.0
        %581 = vmatpush2.msra.mxu0 0.0
        %582 = vmatprep.subr.mxu0 0.0
        %583 = vmatpush2.msra.mxu0 0.0
        %584 = vmatprep.subr.mxu0 0.0
        %585 = vmatpush2.msra.mxu0 0.0
        %586 = vmatprep.subr.mxu0 0.0
        %587 = vmatpush2.msra.mxu0 0.0
        %588 = vmatprep.subr.mxu0 0.0
        %589 = vmatpush2.msra.mxu0 0.0
        %590 = vmatprep.subr.mxu0 0.0
        %591 = vmatpush2.msra.mxu0 0.0
        %592 = vmatprep.subr.mxu0 0.0
        %593 = vmatpush2.msra.mxu0 0.0
        %594 = vmatprep.mubr.f32.mxu0 0.0
        %595 = vmatmul.mubr.f32.gmra.mxu0 %v519
        %v596 = vpop.f32.mrf.mxu0
        %v597 = vadd.f32 %v500, %v596
        %v598 = vpop.f32.mrf.mxu0
        %599 = vmatprep.mubr.f32.mxu0 0.0
        %600 = vmatmul.mubr.f32.gmra.mxu0 %v522
        %v601 = vpop.f32.mrf.mxu0
        %v602 = vadd.f32 %v505, %v601
        %v603 = vpop.f32.mrf.mxu0
        %604 = vmatprep.mubr.f32.mxu0 0.0
        %605 = vmatmul.mubr.f32.gmra.mxu0 %v525
        %v606 = vpop.f32.mrf.mxu0
        %v607 = vadd.f32 %v510, %v606
        %v608 = vpop.f32.mrf.mxu0
        %609 = vmatprep.mubr.f32.mxu0 0.0
        %610 = vmatmul.mubr.f32.gmra.mxu0 %v528
        %v611 = vpop.f32.mrf.mxu0
        %v612 = vadd.f32 %v515, %v611
        %v613 = vpop.f32.mrf.mxu0
        %614 = vdwg.mxu0
        %v615 = vmax.f32 %v597, 0.0
        %v616 = vmax.f32 %v602, 0.0
        %v617 = vmax.f32 %v607, 0.0
        %v618 = vmax.f32 %v612, 0.0
        %v619 = vand.u32 2147483647, %v597
        %v620 = vand.u32 2147483647, %v602
        %v621 = vand.u32 2147483647, %v607
        %v622 = vand.u32 2147483647, %v612
        %v623 = vsub.f32 0.0, %v619
        %v624 = vsub.f32 0.0, %v620
        %v625 = vsub.f32 0.0, %v621
        %v626 = vsub.f32 0.0, %v622
        %v627 = vmul.f32 %v623, 1.442695
        %v628 = vpow.pop %v627
        %v629 = vmul.f32 %v624, 1.442695
        %v630 = vpow.pop %v629
        %v631 = vmul.f32 %v625, 1.442695
        %v632 = vpow.pop %v631
        %v633 = vmul.f32 %v626, 1.442695
        %v634 = vpow.pop %v633
        %v635 = vadd.f32 %v628, 1.0
        %v636 = vadd.f32 %v630, 1.0
        %v637 = vadd.f32 %v632, 1.0
        %v638 = vadd.f32 %v634, 1.0
        %v639 = vlog2.pop %v635
        %v640 = vmul.f32 %v639, 0.6931472
        %v641 = vlog2.pop %v636
        %v642 = vmul.f32 %v641, 0.6931472
        %v643 = vlog2.pop %v637
        %v644 = vmul.f32 %v643, 0.6931472
        %v645 = vlog2.pop %v638
        %v646 = vmul.f32 %v645, 0.6931472
        %v647 = vadd.f32 %v615, %v640
        %v648 = vadd.f32 %v616, %v642
        %v649 = vadd.f32 %v617, %v644
        %v650 = vadd.f32 %v618, %v646
        %v651 = vld [vmem:[%s5] sm:$0xff]
        %v652 = vld [vmem:[%s5 + $0x8] sm:$0xff]
        %v653 = vld [vmem:[%s5 + $0x10] sm:$0xf]
        %v654 = vld [vmem:[%s6] sm:$0xff]
        %v655 = vld [vmem:[%s6 + $0x8] sm:$0xff]
        %v656 = vld [vmem:[%s6 + $0x10] sm:$0xf]
        %658 = vset.pattern.permute.xlu0 0
        %659 = vperm.xlu0 %658, %v654
        %v660 = vpop.permute.xlu0 %659
        %663 = vset.pattern.permute.xlu0 0
        %664 = vperm.xlu0 %663, %v655
        %v665 = vpop.permute.xlu0 %664
        %668 = vset.pattern.permute.xlu0 0
        %669 = vperm.xlu0 %668, %v656
        %v670 = vpop.permute.xlu0 %669
        %v673 = vsel %vm517, %v651, 0
        %v676 = vsel %vm517, %v652, 0
        %v679 = vsel %vm517, %v653, 0
        %681 = vmatprep.subr.mxu0 0.0
        %682 = vmatpush1.msra.mxu0 0.0
        %683 = vmatprep.subr.mxu0 0.0
        %684 = vmatpush1.msra.mxu0 0.0
        %685 = vmatprep.subr.mxu0 0.0
        %686 = vmatpush1.msra.mxu0 0.0
        %687 = vmatprep.subr.mxu0 0.0
        %688 = vmatpush1.msra.mxu0 0.0
        %689 = vmatprep.subr.mxu0 0.0
        %690 = vmatpush1.msra.mxu0 0.0
        %691 = vmatprep.subr.mxu0 0.0
        %692 = vmatpush1.msra.mxu0 0.0
        %693 = vmatprep.subr.mxu0 0.0
        %694 = vmatpush1.msra.mxu0 0.0
        %695 = vmatprep.subr.mxu0 0.0
        %696 = vmatpush1.msra.mxu0 0.0
        %697 = vmatprep.subr.mxu0 0.0
        %698 = vmatpush1.msra.mxu0 0.0
        %699 = vmatprep.subr.mxu0 0.0
        %700 = vmatpush1.msra.mxu0 0.0
        %701 = vmatprep.subr.mxu0 0.0
        %702 = vmatpush1.msra.mxu0 0.0
        %703 = vmatprep.subr.mxu0 0.0
        %704 = vmatpush1.msra.mxu0 0.0
        %705 = vmatprep.subr.mxu0 0.0
        %706 = vmatpush1.msra.mxu0 %v650
        %707 = vmatprep.subr.mxu0 0.0
        %708 = vmatpush1.msra.mxu0 %v649
        %709 = vmatprep.subr.mxu0 0.0
        %710 = vmatpush1.msra.mxu0 %v648
        %711 = vmatprep.subr.mxu0 0.0
        %712 = vmatpush1.msra.mxu0 %v647
        %713 = vmatprep.subr.mxu0 0.0
        %714 = vmatpush2.msra.mxu0 0.0
        %715 = vmatprep.subr.mxu0 0.0
        %716 = vmatpush2.msra.mxu0 0.0
        %717 = vmatprep.subr.mxu0 0.0
        %718 = vmatpush2.msra.mxu0 0.0
        %719 = vmatprep.subr.mxu0 0.0
        %720 = vmatpush2.msra.mxu0 0.0
        %721 = vmatprep.subr.mxu0 0.0
        %722 = vmatpush2.msra.mxu0 0.0
        %723 = vmatprep.subr.mxu0 0.0
        %724 = vmatpush2.msra.mxu0 0.0
        %725 = vmatprep.subr.mxu0 0.0
        %726 = vmatpush2.msra.mxu0 0.0
        %727 = vmatprep.subr.mxu0 0.0
        %728 = vmatpush2.msra.mxu0 0.0
        %729 = vmatprep.subr.mxu0 0.0
        %730 = vmatpush2.msra.mxu0 0.0
        %731 = vmatprep.subr.mxu0 0.0
        %732 = vmatpush2.msra.mxu0 0.0
        %733 = vmatprep.subr.mxu0 0.0
        %734 = vmatpush2.msra.mxu0 0.0
        %735 = vmatprep.subr.mxu0 0.0
        %736 = vmatpush2.msra.mxu0 0.0
        %737 = vmatprep.subr.mxu0 0.0
        %738 = vmatpush2.msra.mxu0 0.0
        %739 = vmatprep.subr.mxu0 0.0
        %740 = vmatpush2.msra.mxu0 0.0
        %741 = vmatprep.subr.mxu0 0.0
        %742 = vmatpush2.msra.mxu0 0.0
        %743 = vmatprep.subr.mxu0 0.0
        %744 = vmatpush2.msra.mxu0 0.0
        %745 = vmatprep.mubr.f32.mxu0 0.0
        %746 = vmatmul.mubr.f32.gmra.mxu0 %v673
        %v747 = vpop.f32.mrf.mxu0
        %v748 = vadd.f32 %v660, %v747
        %v749 = vpop.f32.mrf.mxu0
        %750 = vmatprep.mubr.f32.mxu0 0.0
        %751 = vmatmul.mubr.f32.gmra.mxu0 %v676
        %v752 = vpop.f32.mrf.mxu0
        %v753 = vadd.f32 %v665, %v752
        %v754 = vpop.f32.mrf.mxu0
        %755 = vmatprep.mubr.f32.mxu0 0.0
        %756 = vmatmul.mubr.f32.gmra.mxu0 %v679
        %v757 = vpop.f32.mrf.mxu0
        %v758 = vadd.f32 %v670, %v757
        %v759 = vpop.f32.mrf.mxu0
        %760 = vdwg.mxu0
        %761 = vst [vmem:[%s319] sm:$0xff] %v748
        %762 = vst [vmem:[%s319 + $0x8] sm:$0xff] %v753
        %763 = vst [vmem:[%s319 + $0x10] sm:$0xf] %v758
        %s764 = sand.u32 %s181, 1
        %s765 = scalar_lea.sflag [#allocation4], %s764
        %s766 = sand.u32 %s181, 1
        %s767 = smul.addr %s766, 24
        %s768 = scalar_lea.vmem [#allocation3], %s767
        // Predicated region
        $region87: #{tpu_custom_call.1} parent=81 // pred_check
          %p769 = pneg %p191
        $region88: #{tpu_custom_call.1} parent=81 // pred_check_branch
          %771 = sbr.rel (%p769) target = $region90
        $region89: #{tpu_custom_call.1} parent=81 // pred_region
          %s773 = ssub.s32 384, 384
          %774 = vsyncadd %s765, %s773
          %s775 = smul.addr %s21, 128
          %s776 = scalar_lea.hbm %s7, %s775
          %s777 = sshll.u32 %s768, 4
          %s778 = int_to_ptr.vmem [resolvable:$true] %s777
          %783 = dma.vmem_to_hbm [thread:$0]  %s778, 384, %s776, %s765, 128, 256, 8
        $region90: #{tpu_custom_call.1} parent=81 // pred_fallthru
          _
      $region82: #{tpu_custom_call.1} parent=5 // pred_fallthru
        _
      %p784 = scmp.le.s32.totalorder 2, %s16
      // Predicated region
      $region91: #{tpu_custom_call.1} parent=5 // pred_check
        %p785 = pneg %p784
      $region92: #{tpu_custom_call.1} parent=5 // pred_check_branch
        %787 = sbr.rel (%p785) target = $region94
      $region93: #{tpu_custom_call.1} parent=5 // pred_region
        %s788 = ssub.s32 %s16, 2
        // Predicated region
        $region95: #{tpu_custom_call.1} parent=93 // pred_check
          %p789 = pneg %p197
        $region96: #{tpu_custom_call.1} parent=93 // pred_check_branch
          %791 = sbr.rel (%p789) target = $region98
        $region97: #{tpu_custom_call.1} parent=93 // pred_region
          %s792 = sand.u32 %s182, 1
          %s793 = scalar_lea.sflag [#allocation4], %s792
          %s794 = sand.u32 %s182, 1
          %s795 = smul.addr %s794, 24
          %s796 = scalar_lea.vmem [#allocation3], %s795
          %797 = dma.done %s793, 384
        $region98: #{tpu_custom_call.1} parent=93 // pred_fallthru
          _
      $region94: #{tpu_custom_call.1} parent=5 // pred_fallthru
        _
    $region6: #{tpu_custom_call.1} parent=1 // loop_footer
      %s20 = sadd.s32 1, %s16
    $region7: #{tpu_custom_call.1} parent=1 // loop_footer_branch
      %15 = sbr.rel target = $region3
    $region8: #{tpu_custom_call.1} parent=1 // loop_exit
      _
    %798 = vsyncpa [#allocation4], 1
    %s799 = scalar_lea.sflag [#allocation4], 1
    %800 = vsyncpa %s799, 1

</llo_original>
